<compile_context>
chip_gen: v6e
topology: v6e:2x2x1
jax: 0.10.0
libtpu: 0.0.40
codegen_flags: <defaults>
</compile_context>

<pallas_src>
import jax
import jax.numpy as jnp
from jax import lax
from jax.experimental import pallas as pl
from jax.experimental.pallas import tpu as pltpu

NEG_SLOPE = 0.01  # torch.nn.LeakyReLU default

# dot_general dims for  A(M, K) contracted with B(N, K) on K  ->  (M, N)
# (rhs-transposed contraction, same pattern as q @ k.T).
_NT_DIMS = (((1,), (1,)), ((), ()))

# Batches at or below this size are handled as a single full-extent block
# (no alignment/padding constraints apply when block == array dims).
_SMALL_BATCH = 512


def _leaky_relu(x):
    return jnp.where(x > 0, x, NEG_SLOPE * x)


def _round_up(n, m):
    return ((n + m - 1) // m) * m


def mlp_kernel(x_ref, w1_ref, b1_ref, w2_ref, b2_ref, w3_ref, b3_ref, o_ref):
    """Fused 3-layer MLP, computed transposed (batch on the lane axis).

    x_ref : (tile_b, 20)        -- batch-major, contiguous DMA from HBM
    w*_ref: (out, in)           -- torch-native layout, resident in VMEM
    b*_ref: (out, 1)      f32
    o_ref : (4, tile_b)         -- lane-dense output slab (y^T)
    """
    x = x_ref[...]                                               # (tile_b, 20)

    # layer 1 (linin): h1^T = LeakyReLU(W1 @ x^T + b1), f32 accumulation.
    h1 = lax.dot_general(w1_ref[...], x, _NT_DIMS,
                         preferred_element_type=jnp.float32)     # (30, tile_b)
    h1 = _leaky_relu(h1 + b1_ref[...])

    # layer 2 (torch "layer3"): lane-dense operands, stays f32.
    h2 = jnp.dot(w2_ref[...], h1,
                 preferred_element_type=jnp.float32)             # (10, tile_b)
    h2 = _leaky_relu(h2 + b2_ref[...])

    # layer 3 (torch "layer2") + sigmoid, stored as a lane-dense (4, tile_b).
    h3 = jnp.dot(w3_ref[...], h2,
                 preferred_element_type=jnp.float32)             # (4, tile_b)
    o_ref[...] = jax.nn.sigmoid(h3 + b3_ref[...]).astype(o_ref.dtype)


def _choose_tile(B, tile_b):
    """Pick the batch tile and grid size.

    Small batches get one full-extent block (no padding/alignment needed).
    Large batches get 128-aligned tiles, clamped so the grid keeps >= 2 steps
    (both v7x TensorCores busy); the last block may be partial -- Pallas masks
    the out-of-bounds part of the load/store.
    """
    if B <= _SMALL_BATCH:
        return B, 1
    tile = _round_up(min(tile_b, B), 128)
    tile = min(tile, _round_up(pl.cdiv(B, 2), 128))   # keep >= 2 grid steps
    tile = max(tile, 128)
    return tile, pl.cdiv(B, tile)


def ann_model0_forward(x, params, *, tile_b=8192, out_dtype=jnp.float32,
                       batch_major=False):
    """Run the fused MLP.

    x: (B, 20).  Returns y^T = (4, B) by default (kernel-native, lane-dense,
    no extra HBM pass).  Pass batch_major=True for the torch-shaped (B, 4)
    result (adds one small XLA transpose of the (4, B) output).
    """
    w1, b1, w2, b2, w3, b3 = params
    B, d_in = x.shape
    assert d_in == w1.shape[1]
    d_out = w3.shape[0]

    tile, steps = _choose_tile(B, tile_b)
    grid = (steps,)

    y_t = pl.pallas_call(
        mlp_kernel,
        out_shape=jax.ShapeDtypeStruct((d_out, B), out_dtype),
        grid_spec=pltpu.PrefetchScalarGridSpec(
            num_scalar_prefetch=0,
            grid=grid,
            in_specs=[
                # x: tiled over batch, contiguous (tile, 20) blocks; the last
                # block may be partial (masked by Pallas).
                pl.BlockSpec((tile, d_in), lambda i: (i, 0)),
                # Weights / biases: constant block index -> fetched into VMEM
                # once and reused across every grid step (~60 KB padded).
                pl.BlockSpec(w1.shape, lambda i: (0, 0)),
                pl.BlockSpec(b1.shape, lambda i: (0, 0)),
                pl.BlockSpec(w2.shape, lambda i: (0, 0)),
                pl.BlockSpec(b2.shape, lambda i: (0, 0)),
                pl.BlockSpec(w3.shape, lambda i: (0, 0)),
                pl.BlockSpec(b3.shape, lambda i: (0, 0)),
            ],
            # Lane-dense output: (4, tile) slab of y^T.
            out_specs=pl.BlockSpec((d_out, tile), lambda i: (0, i)),
        ),
        compiler_params=pltpu.CompilerParams(
            # Batch axis is embarrassingly parallel (megacore / v7x 2xTC).
            dimension_semantics=("parallel",),
            # Explicit limit so the 8K default tile also fits v5e's scoped
            # VMEM (16 MiB default there); 32 MiB is safe on every generation.
            vmem_limit_bytes=32 * 1024 * 1024,
        ),
    )(x, w1, b1, w2, b2, w3, b3)

    if batch_major:
        # Torch-layout result; this is an extra (small) pass over (4, B) only.
        return y_t.T
    return y_t


def prepare_params(params, dtype=jnp.float32):
    """One-off, off-hot-path dtype conversion of the parameters.

    Call this once (e.g. with jnp.bfloat16 if x arrives as bf16 upstream);
    the forward wrapper itself never casts anything per call.
    """
    w1, b1, w2, b2, w3, b3 = params
    return (w1.astype(dtype), b1.astype(jnp.float32),
            w2.astype(dtype), b2.astype(jnp.float32),
            w3.astype(dtype), b3.astype(jnp.float32))


def init_params(key):
    """Torch-style init: W (out, in) and b (out, 1), U[-1/sqrt(fan_in), +...]."""
    def linear(k, fan_in, fan_out):
        kw, kb = jax.random.split(k)
        bound = 1.0 / jnp.sqrt(float(fan_in))
        w = jax.random.uniform(kw, (fan_out, fan_in), jnp.float32, -bound, bound)
        b = jax.random.uniform(kb, (fan_out, 1), jnp.float32, -bound, bound)
        return w, b

    k1, k2, k3 = jax.random.split(key, 3)
    w1, b1 = linear(k1, 20, 30)   # linin
    w2, b2 = linear(k2, 30, 10)   # layer3 (applied second in forward)
    w3, b3 = linear(k3, 10, 4)    # layer2 (applied third in forward)
    return (w1, b1, w2, b2, w3, b3)


def reference_forward(x, params):
    """Pure-JAX f32 reference with torch Linear semantics (returns (B, 4))."""
    w1, b1, w2, b2, w3, b3 = params
    h1 = _leaky_relu(x @ w1.T + b1[:, 0])
    h2 = _leaky_relu(h1 @ w2.T + b2[:, 0])
    return jax.nn.sigmoid(h2 @ w3.T + b3[:, 0])


if __name__ == "__main__":
    key = jax.random.PRNGKey(0)
    kx, kp = jax.random.split(key)
    params = prepare_params(init_params(kp))   # no-op f32 prep, off hot path

    # Small single-block smoke test (kernel-native transposed output).
    batch = 8
    x = jax.random.normal(kx, (batch, 20), dtype=jnp.float32)
    y_t = jax.block_until_ready(ann_model0_forward(x, params))
    ref = reference_forward(x, params)
    assert y_t.shape == (4, batch)
    assert jnp.allclose(y_t.T, ref, atol=2e-2, rtol=2e-2), \
        float(jnp.max(jnp.abs(y_t.T - ref)))

    # Torch-layout (batch-major) path.
    y = jax.block_until_ready(ann_model0_forward(x, params, batch_major=True))
    assert y.shape == (batch, 4)
    assert jnp.allclose(y, ref, atol=2e-2, rtol=2e-2), \
        float(jnp.max(jnp.abs(y - ref)))

    # Multi-step grid with a ragged (partial) last block: 1000 rows, tile 256
    # -> 4 grid steps, last block has 232 valid rows (no jnp.pad anywhere).
    batch2 = 1000
    x2 = jax.random.normal(jax.random.PRNGKey(1), (batch2, 20), dtype=jnp.float32)
    y2 = jax.block_until_ready(
        ann_model0_forward(x2, params, tile_b=256, batch_major=True))
    ref2 = reference_forward(x2, params)
    assert y2.shape == (batch2, 4)
    assert jnp.allclose(y2, ref2, atol=2e-2, rtol=2e-2), \
        float(jnp.max(jnp.abs(y2 - ref2)))

    print("KERNEL_OK")
</pallas_src>

<mosaic_0001>
module attributes {stable_mosaic.version = 11 : i64} {
  func.func @mlp_kernel(%arg0: i32, %arg1: memref<8x20xf32, #tpu.memory_space<vmem>>, %arg2: memref<30x20xf32, #tpu.memory_space<vmem>>, %arg3: memref<30x1xf32, #tpu.memory_space<vmem>>, %arg4: memref<10x30xf32, #tpu.memory_space<vmem>>, %arg5: memref<10x1xf32, #tpu.memory_space<vmem>>, %arg6: memref<4x10xf32, #tpu.memory_space<vmem>>, %arg7: memref<4x1xf32, #tpu.memory_space<vmem>>, %arg8: memref<4x8xf32, #tpu.memory_space<vmem>>) attributes {dimension_semantics = [#tpu.dimension_semantics<parallel>], iteration_bounds = array<i64: 1>, scalar_prefetch = 0 : i64, scratch_operands = 0 : i64, tpu.core_type = #tpu.core_type<tc>, window_params = [{transform_indices = @transform_0, window_bounds = array<i64: 8, 20>}, {pipeline_mode = #tpu.pipeline_mode<synchronous>, transform_indices = @transform_1, window_bounds = array<i64: 30, 20>}, {pipeline_mode = #tpu.pipeline_mode<synchronous>, transform_indices = @transform_2, window_bounds = array<i64: 30, 1>}, {pipeline_mode = #tpu.pipeline_mode<synchronous>, transform_indices = @transform_3, window_bounds = array<i64: 10, 30>}, {pipeline_mode = #tpu.pipeline_mode<synchronous>, transform_indices = @transform_4, window_bounds = array<i64: 10, 1>}, {pipeline_mode = #tpu.pipeline_mode<synchronous>, transform_indices = @transform_5, window_bounds = array<i64: 4, 10>}, {pipeline_mode = #tpu.pipeline_mode<synchronous>, transform_indices = @transform_6, window_bounds = array<i64: 4, 1>}, {transform_indices = @transform_7, window_bounds = array<i64: 4, 8>}]} {
    %c0 = arith.constant 0 : index
    %c0_0 = arith.constant 0 : index
    %0 = vector.load %arg1[%c0, %c0_0] : memref<8x20xf32, #tpu.memory_space<vmem>>, vector<8x20xf32>
    %c0_1 = arith.constant 0 : index
    %c0_2 = arith.constant 0 : index
    %1 = vector.load %arg2[%c0_1, %c0_2] : memref<30x20xf32, #tpu.memory_space<vmem>>, vector<30x20xf32>
    %cst = arith.constant dense<0.000000e+00> : vector<30x8xf32>
    %2 = tpu.matmul %1, %0, %cst {dimension_numbers = #tpu.dot_dimension_numbers<[1], [1], [0], [0], [0, 0, 1, 0], [], []>} : vector<30x20xf32>, vector<8x20xf32>, vector<30x8xf32> -> vector<30x8xf32>
    %c0_3 = arith.constant 0 : index
    %c0_4 = arith.constant 0 : index
    %3 = vector.load %arg3[%c0_3, %c0_4] : memref<30x1xf32, #tpu.memory_space<vmem>>, vector<30x1xf32>
    %4 = vector.broadcast %3 : vector<30x1xf32> to vector<30x8xf32>
    %5 = arith.addf %2, %4 : vector<30x8xf32>
    %cst_5 = arith.constant 0.000000e+00 : f32
    %6 = vector.broadcast %cst_5 : f32 to vector<30x8xf32>
    %7 = arith.cmpf ogt, %5, %6 : vector<30x8xf32>
    %cst_6 = arith.constant 0.00999999977 : f32
    %8 = vector.broadcast %cst_6 : f32 to vector<30x8xf32>
    %9 = arith.mulf %8, %5 : vector<30x8xf32>
    %10 = arith.select %7, %5, %9 : vector<30x8xi1>, vector<30x8xf32>
    %c0_7 = arith.constant 0 : index
    %c0_8 = arith.constant 0 : index
    %11 = vector.load %arg4[%c0_7, %c0_8] : memref<10x30xf32, #tpu.memory_space<vmem>>, vector<10x30xf32>
    %cst_9 = arith.constant dense<0.000000e+00> : vector<10x8xf32>
    %12 = tpu.matmul %11, %10, %cst_9 {dimension_numbers = #tpu.dot_dimension_numbers<[1], [0], [0], [1], [0, 0, 1, 1], [], []>} : vector<10x30xf32>, vector<30x8xf32>, vector<10x8xf32> -> vector<10x8xf32>
    %c0_10 = arith.constant 0 : index
    %c0_11 = arith.constant 0 : index
    %13 = vector.load %arg5[%c0_10, %c0_11] : memref<10x1xf32, #tpu.memory_space<vmem>>, vector<10x1xf32>
    %14 = vector.broadcast %13 : vector<10x1xf32> to vector<10x8xf32>
    %15 = arith.addf %12, %14 : vector<10x8xf32>
    %cst_12 = arith.constant 0.000000e+00 : f32
    %16 = vector.broadcast %cst_12 : f32 to vector<10x8xf32>
    %17 = arith.cmpf ogt, %15, %16 : vector<10x8xf32>
    %cst_13 = arith.constant 0.00999999977 : f32
    %18 = vector.broadcast %cst_13 : f32 to vector<10x8xf32>
    %19 = arith.mulf %18, %15 : vector<10x8xf32>
    %20 = arith.select %17, %15, %19 : vector<10x8xi1>, vector<10x8xf32>
    %c0_14 = arith.constant 0 : index
    %c0_15 = arith.constant 0 : index
    %21 = vector.load %arg6[%c0_14, %c0_15] : memref<4x10xf32, #tpu.memory_space<vmem>>, vector<4x10xf32>
    %cst_16 = arith.constant dense<0.000000e+00> : vector<4x8xf32>
    %22 = tpu.matmul %21, %20, %cst_16 {dimension_numbers = #tpu.dot_dimension_numbers<[1], [0], [0], [1], [0, 0, 1, 1], [], []>} : vector<4x10xf32>, vector<10x8xf32>, vector<4x8xf32> -> vector<4x8xf32>
    %c0_17 = arith.constant 0 : index
    %c0_18 = arith.constant 0 : index
    %23 = vector.load %arg7[%c0_17, %c0_18] : memref<4x1xf32, #tpu.memory_space<vmem>>, vector<4x1xf32>
    %24 = vector.broadcast %23 : vector<4x1xf32> to vector<4x8xf32>
    %25 = arith.addf %22, %24 : vector<4x8xf32>
    %26 = arith.negf %25 : vector<4x8xf32>
    %27 = math.exp %26 : vector<4x8xf32>
    %cst_19 = arith.constant 1.000000e+00 : f32
    %28 = vector.broadcast %cst_19 : f32 to vector<4x8xf32>
    %29 = arith.addf %28, %27 : vector<4x8xf32>
    %30 = arith.divf %28, %29 : vector<4x8xf32>
    %c0_20 = arith.constant 0 : index
    %c0_21 = arith.constant 0 : index
    %31 = vector.load %arg8[%c0_20, %c0_21] : memref<4x8xf32, #tpu.memory_space<vmem>>, vector<4x8xf32>
    tpu.vector_store %arg8[%c0_20, %c0_21], %30 {strides = array<i32>} : memref<4x8xf32, #tpu.memory_space<vmem>>, vector<4x8xf32>,
    return
  }
  func.func @transform_0(%arg0: i32) -> (i32, i32) {
    %c0_i32 = arith.constant 0 : i32
    %c0_i32_0 = arith.constant 0 : i32
    return %arg0, %c0_i32 : i32, i32
  }
  func.func @transform_1(%arg0: i32) -> (i32, i32) {
    %c0_i32 = arith.constant 0 : i32
    %c0_i32_0 = arith.constant 0 : i32
    %c0_i32_1 = arith.constant 0 : i32
    return %c0_i32, %c0_i32_0 : i32, i32
  }
  func.func @transform_2(%arg0: i32) -> (i32, i32) {
    %c0_i32 = arith.constant 0 : i32
    %c0_i32_0 = arith.constant 0 : i32
    %c0_i32_1 = arith.constant 0 : i32
    return %c0_i32, %c0_i32_0 : i32, i32
  }
  func.func @transform_3(%arg0: i32) -> (i32, i32) {
    %c0_i32 = arith.constant 0 : i32
    %c0_i32_0 = arith.constant 0 : i32
    %c0_i32_1 = arith.constant 0 : i32
    return %c0_i32, %c0_i32_0 : i32, i32
  }
  func.func @transform_4(%arg0: i32) -> (i32, i32) {
    %c0_i32 = arith.constant 0 : i32
    %c0_i32_0 = arith.constant 0 : i32
    %c0_i32_1 = arith.constant 0 : i32
    return %c0_i32, %c0_i32_0 : i32, i32
  }
  func.func @transform_5(%arg0: i32) -> (i32, i32) {
    %c0_i32 = arith.constant 0 : i32
    %c0_i32_0 = arith.constant 0 : i32
    %c0_i32_1 = arith.constant 0 : i32
    return %c0_i32, %c0_i32_0 : i32, i32
  }
  func.func @transform_6(%arg0: i32) -> (i32, i32) {
    %c0_i32 = arith.constant 0 : i32
    %c0_i32_0 = arith.constant 0 : i32
    %c0_i32_1 = arith.constant 0 : i32
    return %c0_i32, %c0_i32_0 : i32, i32
  }
  func.func @transform_7(%arg0: i32) -> (i32, i32) {
    %c0_i32 = arith.constant 0 : i32
    %c0_i32_0 = arith.constant 0 : i32
    return %c0_i32, %arg0 : i32, i32
  }
}

</mosaic_0001>

<llo_original>
// kernel: tpu_custom_call.1
$region0: #{tpu_custom_call.1}
  #allocation0 [shape = 'u32[]', space=smem, size = 0x4, offset = 0x4, fixed_abs, tag = 'smem constant byte address 0x4 - core index']
  #allocation1 [shape = 'u32[144,128]{1,0:T(1,128)}', space=vmem, size = 0x12000, scoped, tag = 'internal scratch']
  %s0 = inlined_call_operand.vmem [shape: f32[8,20], index: 0, kind: input, shape index: {}]
  %s1 = inlined_call_operand.vmem [shape: f32[30,20], index: 1, kind: input, shape index: {}]
  %s2 = inlined_call_operand.vmem [shape: f32[30,1], index: 2, kind: input, shape index: {}]
  %s3 = inlined_call_operand.vmem [shape: f32[10,30], index: 3, kind: input, shape index: {}]
  %s4 = inlined_call_operand.vmem [shape: f32[10,1], index: 4, kind: input, shape index: {}]
  %s5 = inlined_call_operand.vmem [shape: f32[4,10], index: 5, kind: input, shape index: {}]
  %s6 = inlined_call_operand.vmem [shape: f32[4,1], index: 6, kind: input, shape index: {}]
  %s7 = inlined_call_operand.hbm [shape: f32[4,8], index: 7, kind: output, shape index: {}]
  %s8 = sld [smem:[#allocation0]]
  $region38: #{tpu_custom_call.1} parent=0
    _
  %s10 = ssub.s32 1, %s8
  %s11 = scalar_select 0, %s10, %s8
  $region1: #{tpu_custom_call.1} parent=0
    #allocation2 [shape = 'u8[2048]{0}', space=vmem, size = 0x800, scoped, tag = 'output window, operand 0, single buffered']
    #allocation3 [shape = 's32[1]{0}', space=sflag, size = 0x4, scoped, tag = 'scoped memory for tpu_custom_call.1']
    %12 = vsyncpa [#allocation3], 0
    // Predicated region
    $region2: #{tpu_custom_call.1} parent=1 // pred_check
      _
    $region3: #{tpu_custom_call.1} parent=1 // pred_check_branch
      %14 = sbr.rel (0) target = $region5
    $region4: #{tpu_custom_call.1} parent=1 // pred_region
      _
    $region5: #{tpu_custom_call.1} parent=1 // pred_fallthru
      _
    // Predicated region
    $region6: #{tpu_custom_call.1} parent=1 // pred_check
      _
    $region7: #{tpu_custom_call.1} parent=1 // pred_check_branch
      %16 = sbr.rel (0) target = $region9
    $region8: #{tpu_custom_call.1} parent=1 // pred_region
      _
    $region9: #{tpu_custom_call.1} parent=1 // pred_fallthru
      _
    // Predicated region
    $region10: #{tpu_custom_call.1} parent=1 // pred_check
      _
    $region11: #{tpu_custom_call.1} parent=1 // pred_check_branch
      %18 = sbr.rel (0) target = $region13
    $region12: #{tpu_custom_call.1} parent=1 // pred_region
      _
    $region13: #{tpu_custom_call.1} parent=1 // pred_fallthru
      _
    // Predicated region
    $region14: #{tpu_custom_call.1} parent=1 // pred_check
      _
    $region15: #{tpu_custom_call.1} parent=1 // pred_check_branch
      %20 = sbr.rel (0) target = $region17
    $region16: #{tpu_custom_call.1} parent=1 // pred_region
      _
    $region17: #{tpu_custom_call.1} parent=1 // pred_fallthru
      _
    // Predicated region
    $region18: #{tpu_custom_call.1} parent=1 // pred_check
      _
    $region19: #{tpu_custom_call.1} parent=1 // pred_check_branch
      %22 = sbr.rel (0) target = $region21
    $region20: #{tpu_custom_call.1} parent=1 // pred_region
      _
    $region21: #{tpu_custom_call.1} parent=1 // pred_fallthru
      _
    // Predicated region
    $region22: #{tpu_custom_call.1} parent=1 // pred_check
      _
    $region23: #{tpu_custom_call.1} parent=1 // pred_check_branch
      %24 = sbr.rel (0) target = $region25
    $region24: #{tpu_custom_call.1} parent=1 // pred_region
      _
    $region25: #{tpu_custom_call.1} parent=1 // pred_fallthru
      _
    // Predicated region
    $region26: #{tpu_custom_call.1} parent=1 // pred_check
      _
    $region27: #{tpu_custom_call.1} parent=1 // pred_check_branch
      %26 = sbr.rel (0) target = $region29
    $region28: #{tpu_custom_call.1} parent=1 // pred_region
      _
    $region29: #{tpu_custom_call.1} parent=1 // pred_fallthru
      _
    %v27 = vld [vmem:[%s0] sm:$0xff]
    %v28 = vld [vmem:[%s1] sm:$0xff]
    %v29 = vld [vmem:[%s1 + $0x8] sm:$0xff]
    %v30 = vld [vmem:[%s1 + $0x10] sm:$0xff]
    %v31 = vld [vmem:[%s1 + $0x18] sm:$0x3f]
    %v32 = vld [vmem:[%s2] sm:$0xff]
    %v33 = vld [vmem:[%s2 + $0x8] sm:$0xff]
    %v34 = vld [vmem:[%s2 + $0x10] sm:$0xff]
    %v35 = vld [vmem:[%s2 + $0x18] sm:$0x3f]
    %37 = vset.pattern.permute.xlu0 0
    %38 = vperm.xlu0 %37, %v32
    %v39 = vpop.permute.xlu0 %38
    %42 = vset.pattern.permute.xlu0 0
    %43 = vperm.xlu0 %42, %v33
    %v44 = vpop.permute.xlu0 %43
    %47 = vset.pattern.permute.xlu0 0
    %48 = vperm.xlu0 %47, %v34
    %v49 = vpop.permute.xlu0 %48
    %52 = vset.pattern.permute.xlu0 0
    %53 = vperm.xlu0 %52, %v35
    %v54 = vpop.permute.xlu0 %53
    %vm56 = vcmask 162816
    %v58 = vsel %vm56, %v28, 0
    %v61 = vsel %vm56, %v29, 0
    %v64 = vsel %vm56, %v30, 0
    %v67 = vsel %vm56, %v31, 0
    %v70 = vsel %vm56, %v27, 0
    %72 = vmatprep.subr.mxu0 0.0
    %73 = vmatpush1.xpose.msra.mxu0 0.0
    %74 = vmatprep.subr.mxu0 0.0
    %75 = vmatpush1.xpose.msra.mxu0 0.0
    %76 = vmatprep.subr.mxu0 0.0
    %77 = vmatpush1.xpose.msra.mxu0 0.0
    %78 = vmatprep.subr.mxu0 0.0
    %79 = vmatpush1.xpose.msra.mxu0 0.0
    %80 = vmatprep.subr.mxu0 0.0
    %81 = vmatpush1.xpose.msra.mxu0 0.0
    %82 = vmatprep.subr.mxu0 0.0
    %83 = vmatpush1.xpose.msra.mxu0 0.0
    %84 = vmatprep.subr.mxu0 0.0
    %85 = vmatpush1.xpose.msra.mxu0 0.0
    %86 = vmatprep.subr.mxu0 0.0
    %87 = vmatpush1.xpose.msra.mxu0 0.0
    %88 = vmatprep.subr.mxu0 0.0
    %89 = vmatpush1.xpose.msra.mxu0 0.0
    %90 = vmatprep.subr.mxu0 0.0
    %91 = vmatpush1.xpose.msra.mxu0 0.0
    %92 = vmatprep.subr.mxu0 0.0
    %93 = vmatpush1.xpose.msra.mxu0 0.0
    %94 = vmatprep.subr.mxu0 0.0
    %95 = vmatpush1.xpose.msra.mxu0 0.0
    %96 = vmatprep.subr.mxu0 0.0
    %97 = vmatpush1.xpose.msra.mxu0 0.0
    %98 = vmatprep.subr.mxu0 0.0
    %99 = vmatpush1.xpose.msra.mxu0 0.0
    %100 = vmatprep.subr.mxu0 0.0
    %101 = vmatpush1.xpose.msra.mxu0 0.0
    %102 = vmatprep.subr.mxu0 0.0
    %103 = vmatpush1.xpose.msra.mxu0 %v70
    %104 = vmatprep.subr.mxu0 0.0
    %105 = vmatpush2.xpose.msra.mxu0 0.0
    %106 = vmatprep.subr.mxu0 0.0
    %107 = vmatpush2.xpose.msra.mxu0 0.0
    %108 = vmatprep.subr.mxu0 0.0
    %109 = vmatpush2.xpose.msra.mxu0 0.0
    %110 = vmatprep.subr.mxu0 0.0
    %111 = vmatpush2.xpose.msra.mxu0 0.0
    %112 = vmatprep.subr.mxu0 0.0
    %113 = vmatpush2.xpose.msra.mxu0 0.0
    %114 = vmatprep.subr.mxu0 0.0
    %115 = vmatpush2.xpose.msra.mxu0 0.0
    %116 = vmatprep.subr.mxu0 0.0
    %117 = vmatpush2.xpose.msra.mxu0 0.0
    %118 = vmatprep.subr.mxu0 0.0
    %119 = vmatpush2.xpose.msra.mxu0 0.0
    %120 = vmatprep.subr.mxu0 0.0
    %121 = vmatpush2.xpose.msra.mxu0 0.0
    %122 = vmatprep.subr.mxu0 0.0
    %123 = vmatpush2.xpose.msra.mxu0 0.0
    %124 = vmatprep.subr.mxu0 0.0
    %125 = vmatpush2.xpose.msra.mxu0 0.0
    %126 = vmatprep.subr.mxu0 0.0
    %127 = vmatpush2.xpose.msra.mxu0 0.0
    %128 = vmatprep.subr.mxu0 0.0
    %129 = vmatpush2.xpose.msra.mxu0 0.0
    %130 = vmatprep.subr.mxu0 0.0
    %131 = vmatpush2.xpose.msra.mxu0 0.0
    %132 = vmatprep.subr.mxu0 0.0
    %133 = vmatpush2.xpose.msra.mxu0 0.0
    %134 = vmatprep.subr.mxu0 0.0
    %135 = vmatpush2.xpose.msra.mxu0 0.0
    %136 = vmatprep.mubr.f32.mxu0 0.0
    %137 = vmatmul.mubr.f32.gmra.mxu0 %v58
    %v138 = vpop.f32.mrf.mxu0
    %v139 = vadd.f32 %v39, %v138
    %v140 = vpop.f32.mrf.mxu0
    %141 = vmatprep.mubr.f32.mxu0 0.0
    %142 = vmatmul.mubr.f32.gmra.mxu0 %v61
    %v143 = vpop.f32.mrf.mxu0
    %v144 = vadd.f32 %v44, %v143
    %v145 = vpop.f32.mrf.mxu0
    %146 = vmatprep.mubr.f32.mxu0 0.0
    %147 = vmatmul.mubr.f32.gmra.mxu0 %v64
    %v148 = vpop.f32.mrf.mxu0
    %v149 = vadd.f32 %v49, %v148
    %v150 = vpop.f32.mrf.mxu0
    %151 = vmatprep.mubr.f32.mxu0 0.0
    %152 = vmatmul.mubr.f32.gmra.mxu0 %v67
    %v153 = vpop.f32.mrf.mxu0
    %v154 = vadd.f32 %v54, %v153
    %v155 = vpop.f32.mrf.mxu0
    %156 = vdwg.mxu0
    %vm157 = vcmp.gt.f32.partialorder %v139, 0.0
    %vm158 = vcmp.gt.f32.partialorder %v144, 0.0
    %vm159 = vcmp.gt.f32.partialorder %v149, 0.0
    %vm160 = vcmp.gt.f32.partialorder %v154, 0.0
    %v161 = vmul.f32 %v139, 0.01
    %v162 = vmul.f32 %v144, 0.01
    %v163 = vmul.f32 %v149, 0.01
    %v164 = vmul.f32 %v154, 0.01
    %v165 = vsel %vm157, %v139, %v161
    %v166 = vsel %vm158, %v144, %v162
    %v167 = vsel %vm159, %v149, %v163
    %v168 = vsel %vm160, %v154, %v164
    %v169 = vld [vmem:[%s3] sm:$0xff]
    %v170 = vld [vmem:[%s3 + $0x8] sm:$0x3]
    %v171 = vld [vmem:[%s4] sm:$0xff]
    %v172 = vld [vmem:[%s4 + $0x8] sm:$0x3]
    %174 = vset.pattern.permute.xlu0 0
    %175 = vperm.xlu0 %174, %v171
    %v176 = vpop.permute.xlu0 %175
    %179 = vset.pattern.permute.xlu0 0
    %180 = vperm.xlu0 %179, %v172
    %v181 = vpop.permute.xlu0 %180
    %vm183 = vcmask 244736
    %v185 = vsel %vm183, %v169, 0
    %v188 = vsel %vm183, %v170, 0
    %vm190 = vcmask 1045504
    %v192 = vsel %vm190, %v168, 0
    %194 = vmatprep.subr.mxu0 0.0
    %195 = vmatpush1.msra.mxu0 0.0
    %196 = vmatprep.subr.mxu0 0.0
    %197 = vmatpush1.msra.mxu0 0.0
    %198 = vmatprep.subr.mxu0 0.0
    %199 = vmatpush1.msra.mxu0 0.0
    %200 = vmatprep.subr.mxu0 0.0
    %201 = vmatpush1.msra.mxu0 0.0
    %202 = vmatprep.subr.mxu0 0.0
    %203 = vmatpush1.msra.mxu0 0.0
    %204 = vmatprep.subr.mxu0 0.0
    %205 = vmatpush1.msra.mxu0 0.0
    %206 = vmatprep.subr.mxu0 0.0
    %207 = vmatpush1.msra.mxu0 0.0
    %208 = vmatprep.subr.mxu0 0.0
    %209 = vmatpush1.msra.mxu0 0.0
    %210 = vmatprep.subr.mxu0 0.0
    %211 = vmatpush1.msra.mxu0 0.0
    %212 = vmatprep.subr.mxu0 0.0
    %213 = vmatpush1.msra.mxu0 0.0
    %214 = vmatprep.subr.mxu0 0.0
    %215 = vmatpush1.msra.mxu0 0.0
    %216 = vmatprep.subr.mxu0 0.0
    %217 = vmatpush1.msra.mxu0 0.0
    %218 = vmatprep.subr.mxu0 0.0
    %219 = vmatpush1.msra.mxu0 %v192
    %220 = vmatprep.subr.mxu0 0.0
    %221 = vmatpush1.msra.mxu0 %v167
    %222 = vmatprep.subr.mxu0 0.0
    %223 = vmatpush1.msra.mxu0 %v166
    %224 = vmatprep.subr.mxu0 0.0
    %225 = vmatpush1.msra.mxu0 %v165
    %226 = vmatprep.subr.mxu0 0.0
    %227 = vmatpush2.msra.mxu0 0.0
    %228 = vmatprep.subr.mxu0 0.0
    %229 = vmatpush2.msra.mxu0 0.0
    %230 = vmatprep.subr.mxu0 0.0
    %231 = vmatpush2.msra.mxu0 0.0
    %232 = vmatprep.subr.mxu0 0.0
    %233 = vmatpush2.msra.mxu0 0.0
    %234 = vmatprep.subr.mxu0 0.0
    %235 = vmatpush2.msra.mxu0 0.0
    %236 = vmatprep.subr.mxu0 0.0
    %237 = vmatpush2.msra.mxu0 0.0
    %238 = vmatprep.subr.mxu0 0.0
    %239 = vmatpush2.msra.mxu0 0.0
    %240 = vmatprep.subr.mxu0 0.0
    %241 = vmatpush2.msra.mxu0 0.0
    %242 = vmatprep.subr.mxu0 0.0
    %243 = vmatpush2.msra.mxu0 0.0
    %244 = vmatprep.subr.mxu0 0.0
    %245 = vmatpush2.msra.mxu0 0.0
    %246 = vmatprep.subr.mxu0 0.0
    %247 = vmatpush2.msra.mxu0 0.0
    %248 = vmatprep.subr.mxu0 0.0
    %249 = vmatpush2.msra.mxu0 0.0
    %250 = vmatprep.subr.mxu0 0.0
    %251 = vmatpush2.msra.mxu0 0.0
    %252 = vmatprep.subr.mxu0 0.0
    %253 = vmatpush2.msra.mxu0 0.0
    %254 = vmatprep.subr.mxu0 0.0
    %255 = vmatpush2.msra.mxu0 0.0
    %256 = vmatprep.subr.mxu0 0.0
    %257 = vmatpush2.msra.mxu0 0.0
    %258 = vmatprep.mubr.f32.mxu0 0.0
    %259 = vmatmul.mubr.f32.gmra.mxu0 %v185
    %v260 = vpop.f32.mrf.mxu0
    %v261 = vadd.f32 %v176, %v260
    %v262 = vpop.f32.mrf.mxu0
    %263 = vmatprep.mubr.f32.mxu0 0.0
    %264 = vmatmul.mubr.f32.gmra.mxu0 %v188
    %v265 = vpop.f32.mrf.mxu0
    %v266 = vadd.f32 %v181, %v265
    %v267 = vpop.f32.mrf.mxu0
    %268 = vdwg.mxu0
    %vm269 = vcmp.gt.f32.partialorder %v261, 0.0
    %vm270 = vcmp.gt.f32.partialorder %v266, 0.0
    %v271 = vmul.f32 %v261, 0.01
    %v272 = vmul.f32 %v266, 0.01
    %v273 = vsel %vm269, %v261, %v271
    %v274 = vsel %vm270, %v266, %v272
    %v275 = vld [vmem:[%s5] sm:$0xf]
    %v276 = vld [vmem:[%s6] sm:$0xf]
    %278 = vset.pattern.permute.xlu0 0
    %279 = vperm.xlu0 %278, %v276
    %v280 = vpop.permute.xlu0 %279
    %vm282 = vcmask 80896
    %v284 = vsel %vm282, %v275, 0
    %vm286 = vcmask 1041408
    %v288 = vsel %vm286, %v274, 0
    %290 = vmatprep.subr.mxu0 0.0
    %291 = vmatpush1.msra.mxu0 0.0
    %292 = vmatprep.subr.mxu0 0.0
    %293 = vmatpush1.msra.mxu0 0.0
    %294 = vmatprep.subr.mxu0 0.0
    %295 = vmatpush1.msra.mxu0 0.0
    %296 = vmatprep.subr.mxu0 0.0
    %297 = vmatpush1.msra.mxu0 0.0
    %298 = vmatprep.subr.mxu0 0.0
    %299 = vmatpush1.msra.mxu0 0.0
    %300 = vmatprep.subr.mxu0 0.0
    %301 = vmatpush1.msra.mxu0 0.0
    %302 = vmatprep.subr.mxu0 0.0
    %303 = vmatpush1.msra.mxu0 0.0
    %304 = vmatprep.subr.mxu0 0.0
    %305 = vmatpush1.msra.mxu0 0.0
    %306 = vmatprep.subr.mxu0 0.0
    %307 = vmatpush1.msra.mxu0 0.0
    %308 = vmatprep.subr.mxu0 0.0
    %309 = vmatpush1.msra.mxu0 0.0
    %310 = vmatprep.subr.mxu0 0.0
    %311 = vmatpush1.msra.mxu0 0.0
    %312 = vmatprep.subr.mxu0 0.0
    %313 = vmatpush1.msra.mxu0 0.0
    %314 = vmatprep.subr.mxu0 0.0
    %315 = vmatpush1.msra.mxu0 0.0
    %316 = vmatprep.subr.mxu0 0.0
    %317 = vmatpush1.msra.mxu0 0.0
    %318 = vmatprep.subr.mxu0 0.0
    %319 = vmatpush1.msra.mxu0 %v288
    %320 = vmatprep.subr.mxu0 0.0
    %321 = vmatpush1.msra.mxu0 %v273
    %322 = vmatprep.subr.mxu0 0.0
    %323 = vmatpush2.msra.mxu0 0.0
    %324 = vmatprep.subr.mxu0 0.0
    %325 = vmatpush2.msra.mxu0 0.0
    %326 = vmatprep.subr.mxu0 0.0
    %327 = vmatpush2.msra.mxu0 0.0
    %328 = vmatprep.subr.mxu0 0.0
    %329 = vmatpush2.msra.mxu0 0.0
    %330 = vmatprep.subr.mxu0 0.0
    %331 = vmatpush2.msra.mxu0 0.0
    %332 = vmatprep.subr.mxu0 0.0
    %333 = vmatpush2.msra.mxu0 0.0
    %334 = vmatprep.subr.mxu0 0.0
    %335 = vmatpush2.msra.mxu0 0.0
    %336 = vmatprep.subr.mxu0 0.0
    %337 = vmatpush2.msra.mxu0 0.0
    %338 = vmatprep.subr.mxu0 0.0
    %339 = vmatpush2.msra.mxu0 0.0
    %340 = vmatprep.subr.mxu0 0.0
    %341 = vmatpush2.msra.mxu0 0.0
    %342 = vmatprep.subr.mxu0 0.0
    %343 = vmatpush2.msra.mxu0 0.0
    %344 = vmatprep.subr.mxu0 0.0
    %345 = vmatpush2.msra.mxu0 0.0
    %346 = vmatprep.subr.mxu0 0.0
    %347 = vmatpush2.msra.mxu0 0.0
    %348 = vmatprep.subr.mxu0 0.0
    %349 = vmatpush2.msra.mxu0 0.0
    %350 = vmatprep.subr.mxu0 0.0
    %351 = vmatpush2.msra.mxu0 0.0
    %352 = vmatprep.subr.mxu0 0.0
    %353 = vmatpush2.msra.mxu0 0.0
    %354 = vmatprep.mubr.f32.mxu0 0.0
    %355 = vmatmul.mubr.f32.gmra.mxu0 %v284
    %v356 = vpop.f32.mrf.mxu0
    %v357 = vadd.f32 %v280, %v356
    %v358 = vpop.f32.mrf.mxu0
    %359 = vdwg.mxu0
    %v360 = vxor.u32 %v357, 2147483648
    %v361 = vmul.f32 %v360, 1.442695
    %v362 = vpow.pop %v361
    %v363 = vadd.f32 %v362, 1.0
    %v364 = vrcp.pop %v363
    %v365 = vmul.f32 1.0, %v364
    %vm366 = vcmask 60416
    %367 = vst.msk [vmem:[#allocation2] sm:$0xf] %vm366, %v365
    // Predicated region
    $region30: #{tpu_custom_call.1} parent=1 // pred_check
      _
    $region31: #{tpu_custom_call.1} parent=1 // pred_check_branch
      %369 = sbr.rel (0) target = $region33
    $region32: #{tpu_custom_call.1} parent=1 // pred_region
      %s371 = ssub.s32 64, 64
      %372 = vsyncadd [#allocation3], %s371
      %s374 = sshll.u32 [#allocation2], 4
      %s375 = int_to_ptr.vmem [resolvable:$true] %s374
      %377 = dma.vmem_to_hbm [thread:$0]  %s375, 64, %s7, [#allocation3]
    $region33: #{tpu_custom_call.1} parent=1 // pred_fallthru
      _
    // Predicated region
    $region34: #{tpu_custom_call.1} parent=1 // pred_check
      _
    $region35: #{tpu_custom_call.1} parent=1 // pred_check_branch
      %379 = sbr.rel (0) target = $region37
    $region36: #{tpu_custom_call.1} parent=1 // pred_region
      %380 = dma.done [#allocation3], 64
    $region37: #{tpu_custom_call.1} parent=1 // pred_fallthru
      _
    %381 = vsyncpa [#allocation3], 1

</llo_original>
